<compile_context>
chip_gen: v6e
topology: v6e:2x2x1
jax: 0.10.0
libtpu: 0.0.40
codegen_flags: <defaults>
</compile_context>

<pallas_src>
import functools

import jax
import jax.numpy as jnp
from jax.experimental import pallas as pl
from jax.experimental.pallas import tpu as pltpu

LANE = 128


def _round_up(v, m):
    return (v + m - 1) // m * m


def _pad2(a, rows, cols):
    r, c = a.shape
    return jnp.pad(a, ((0, rows - r), (0, cols - c)))


def _vmem_capacity_bytes():
    try:
        return int(pltpu.get_tpu_info().vmem_capacity_bytes)
    except Exception:
        return 64 * 1024 * 1024          # conservative fallback (v7x per-TC)


def _vmem_limit_bytes():
    cap = _vmem_capacity_bytes()
    return max(32 * 1024 * 1024, int(cap * 0.9))


# --------------------------- fused whole-stack kernel -------------------------
def _gcn_fused_kernel(*refs, num_layers):
    """All layers in one kernel invocation; everything resident in VMEM.

    refs = (adj, x, w0, b0, w1, b1, ..., out)
    """
    adj_ref, x_ref = refs[0], refs[1]
    o_ref = refs[-1]
    adj = adj_ref[...]                      # [N, N]      bf16
    h = x_ref[...]                          # [N, Fin0]   bf16
    z = None
    for l in range(num_layers):             # static unroll (num_layers is small)
        w_ref = refs[2 + 2 * l]
        b_ref = refs[3 + 2 * l]
        # feature transform (X @ W') -- computed exactly once per layer
        t = jnp.dot(h, w_ref[...], preferred_element_type=jnp.float32)
        # aggregation (Â @ T) + fused (BN-folded) bias
        z = jnp.dot(adj, t.astype(jnp.bfloat16),
                    preferred_element_type=jnp.float32)
        z = z + b_ref[...]
        if l < num_layers - 1:
            h = jnp.maximum(z, 0.0).astype(jnp.bfloat16)   # ReLU (dropout = id in eval)
    o_ref[...] = z                          # f32, lane-dense (pad multiple of 128)


def gcn_stack_fused(adj_b, x_b, ws, bs, *, vmem_limit_bytes):
    """adj_b [N,N] bf16, x_b [N,Fin0p] bf16, ws list of [Finp,Foutp] bf16, bs list of [1,Foutp] f32."""
    n = adj_b.shape[0]
    num_layers = len(ws)
    fout_last = ws[-1].shape[1]
    kernel = functools.partial(_gcn_fused_kernel, num_layers=num_layers)

    in_specs = [pl.BlockSpec((n, n), lambda i: (0, 0)),
                pl.BlockSpec(x_b.shape, lambda i: (0, 0))]
    inputs = [adj_b, x_b]
    for l in range(num_layers):
        in_specs.append(pl.BlockSpec(ws[l].shape, lambda i: (0, 0)))
        in_specs.append(pl.BlockSpec(bs[l].shape, lambda i: (0, 0)))
        inputs.extend([ws[l], bs[l]])

    return pl.pallas_call(
        kernel,
        out_shape=jax.ShapeDtypeStruct((n, fout_last), jnp.float32),
        grid_spec=pltpu.PrefetchScalarGridSpec(
            num_scalar_prefetch=0,
            grid=(1,),                       # single step: no pipeline/launch overhead
            in_specs=in_specs,
            out_specs=pl.BlockSpec((n, fout_last), lambda i: (0, 0)),
        ),
        compiler_params=pltpu.CompilerParams(
            dimension_semantics=("arbitrary",),
            vmem_limit_bytes=vmem_limit_bytes),
    )(*inputs)


# --------------------------- tiled per-layer kernels ---------------------------
def _transform_kernel(x_ref, w_ref, h_ref):
    # T = X @ W' on the MXU, each row tile computed exactly once (layer 0 only;
    # later layers' transforms are fused into the aggregation epilogue).
    h_ref[...] = jnp.dot(x_ref[...], w_ref[...],
                         preferred_element_type=jnp.float32).astype(h_ref.dtype)


def gcn_transform(x, w, *, tile_n, vmem_limit_bytes):
    n, fin = x.shape
    fout = w.shape[1]
    return pl.pallas_call(
        _transform_kernel,
        out_shape=jax.ShapeDtypeStruct((n, fout), jnp.bfloat16),
        grid_spec=pltpu.PrefetchScalarGridSpec(
            num_scalar_prefetch=0,
            grid=(n // tile_n,),
            in_specs=[
                pl.BlockSpec((tile_n, fin), lambda i: (i, 0)),
                pl.BlockSpec((fin, fout), lambda i: (0, 0)),   # invariant weight
            ],
            out_specs=pl.BlockSpec((tile_n, fout), lambda i: (i, 0)),
        ),
        compiler_params=pltpu.CompilerParams(
            dimension_semantics=("parallel",),
            vmem_limit_bytes=vmem_limit_bytes),
    )(x, w)


def _aggregate_kernel(*refs, apply_relu, fuse_next, h_resident, tile_k):
    """acc += Â_tile @ T; finalize: bias, ReLU, and (fused) next-layer X@W."""
    if fuse_next:
        adj_ref, h_ref, b_ref, w_next_ref, o_ref, acc_ref = refs
    else:
        adj_ref, h_ref, b_ref, o_ref, acc_ref = refs
        w_next_ref = None

    k = pl.program_id(1)

    @pl.when(k == 0)
    def _():
        acc_ref[...] = jnp.zeros_like(acc_ref)

    if h_resident:
        # T stays resident in VMEM for the whole grid; slice the K block locally.
        start = pl.multiple_of(k * tile_k, tile_k)
        h_blk = h_ref[pl.ds(start, tile_k), :]
    else:
        h_blk = h_ref[...]

    acc_ref[...] += jnp.dot(adj_ref[...], h_blk,
                            preferred_element_type=jnp.float32)

    @pl.when(k == pl.num_programs(1) - 1)
    def _():
        z = acc_ref[...] + b_ref[...]
        if apply_relu:
            z = jnp.maximum(z, 0.0)
        if fuse_next:
            # next layer's feature transform fused into the epilogue
            z = jnp.dot(z.astype(jnp.bfloat16), w_next_ref[...],
                        preferred_element_type=jnp.float32)
        o_ref[...] = z.astype(o_ref.dtype)


def gcn_aggregate(adj, h, b, w_next, *, apply_relu, out_dtype, tile_n, tile_k,
                  h_resident, vmem_limit_bytes):
    npad = adj.shape[0]
    fout = h.shape[1]
    fuse_next = w_next is not None
    f_next = w_next.shape[1] if fuse_next else fout

    kernel = functools.partial(_aggregate_kernel, apply_relu=apply_relu,
                               fuse_next=fuse_next, h_resident=h_resident,
                               tile_k=tile_k)

    if h_resident:
        h_spec = pl.BlockSpec((npad, fout), lambda i, k: (0, 0))   # invariant -> DMA'd once
    else:
        h_spec = pl.BlockSpec((tile_k, fout), lambda i, k: (k, 0))

    in_specs = [pl.BlockSpec((tile_n, tile_k), lambda i, k: (i, k)),  # Â tile
                h_spec,                                               # T (= X@W)
                pl.BlockSpec((1, fout), lambda i, k: (0, 0))]         # fused bias
    inputs = [adj, h, b]
    if fuse_next:
        in_specs.append(pl.BlockSpec((fout, f_next), lambda i, k: (0, 0)))  # W_{l+1}
        inputs.append(w_next)

    return pl.pallas_call(
        kernel,
        out_shape=jax.ShapeDtypeStruct((npad, f_next), out_dtype),
        grid_spec=pltpu.PrefetchScalarGridSpec(
            num_scalar_prefetch=0,
            grid=(npad // tile_n, npad // tile_k),
            in_specs=in_specs,
            out_specs=pl.BlockSpec((tile_n, f_next), lambda i, k: (i, 0)),
            scratch_shapes=[pltpu.VMEM((tile_n, fout), jnp.float32)],
        ),
        compiler_params=pltpu.CompilerParams(
            dimension_semantics=("parallel", "arbitrary"),
            vmem_limit_bytes=vmem_limit_bytes),
    )(*inputs)


# ------------------------------ parameter prep --------------------------------
def prepare_params(params, apply_batchnorm, eps=1e-5):
    """Fold BN into (W, b) and zero-pad each layer's dims to a multiple of 128."""
    num_layers = len(params)
    ws, bs, dims_pad = [], [], [_round_up(params[0]["w"].shape[0], LANE)]
    for li, layer in enumerate(params):
        w, b = layer["w"], layer["b"]
        fin, fout = w.shape
        is_last = li == num_layers - 1
        if apply_batchnorm and not is_last:
            inv_std = layer["gamma"] / jnp.sqrt(layer["running_var"] + eps)
            w = w * inv_std[None, :]
            b = b * inv_std + (layer["beta"] - layer["running_mean"] * inv_std)
        fin_pad, fout_pad = _round_up(fin, LANE), _round_up(fout, LANE)
        ws.append(_pad2(w, fin_pad, fout_pad).astype(jnp.bfloat16))
        bs.append(jnp.pad(b, (0, fout_pad - fout)).astype(jnp.float32)[None, :])
        dims_pad.append(fout_pad)
    return ws, bs, dims_pad


def _fused_vmem_bytes(n, ws, bs):
    """Estimate fused-path VMEM (2x double-buffered pipeline inputs + live f32 temps)."""
    total = 2 * (n * n * 2)                       # adj bf16
    total += 2 * (n * ws[0].shape[0] * 2)         # x bf16
    for w, b in zip(ws, bs):
        total += 2 * (w.size * 2 + b.size * 4)    # weights/biases
    total += 2 * (n * ws[-1].shape[1] * 4)        # f32 output
    fmax = max(max(w.shape) for w in ws)
    total += 3 * n * fmax * 4                     # live intermediates (t, z, h)
    return total


# ------------------------------ forward wrapper --------------------------------
def gcn_forward_pallas(params, x, adj, *, apply_batchnorm, mode="auto",
                       tile_n=512, tile_k=512, h_resident=None):
    n = x.shape[0]
    out_channels = params[-1]["w"].shape[1]
    ws, bs, dims_pad = prepare_params(params, apply_batchnorm)
    num_layers = len(ws)
    vmem_limit = _vmem_limit_bytes()

    if mode == "auto":
        mode = ("fused"
                if _fused_vmem_bytes(_round_up(n, 8), ws, bs) <= int(0.75 * vmem_limit)
                else "tiled")

    if mode == "fused":
        n8 = _round_up(n, 8)
        adj_b = _pad2(adj, n8, n8).astype(jnp.bfloat16)
        x_b = _pad2(x, n8, dims_pad[0]).astype(jnp.bfloat16)
        out = gcn_stack_fused(adj_b, x_b, ws, bs, vmem_limit_bytes=vmem_limit)
        return out[:n, :out_channels]

    # ----- tiled / scalable path -----
    tile_n = min(tile_n, _round_up(n, LANE))
    tile_k = min(tile_k, _round_up(n, LANE))
    npad = _round_up(n, tile_n)
    if npad % tile_k:                 # keep one square padding so layers chain cleanly
        tile_k = tile_n
    # TODO(synk): the normalized adj cast/pad could be cached across forward calls.
    adj_p = _pad2(adj, npad, npad).astype(jnp.bfloat16)
    x_p = _pad2(x, npad, dims_pad[0]).astype(jnp.bfloat16)

    # layer 0 feature transform (later transforms are fused into aggregation epilogues)
    t = gcn_transform(x_p, ws[0], tile_n=tile_n, vmem_limit_bytes=vmem_limit)
    for l in range(num_layers):
        is_last = l == num_layers - 1
        fout = ws[l].shape[1]
        if h_resident is None:
            resident = (2 * npad * fout * 2) <= vmem_limit // 3
        else:
            resident = h_resident
        t = gcn_aggregate(
            adj_p, t, bs[l],
            ws[l + 1] if not is_last else None,
            apply_relu=not is_last,
            out_dtype=jnp.float32 if is_last else jnp.bfloat16,
            tile_n=tile_n, tile_k=tile_k, h_resident=resident,
            vmem_limit_bytes=vmem_limit)
    return t[:n, :out_channels]


# ----------------------------- synthetic model data ----------------------------
def init_gcn_params(key, in_channels, hidden_channels, out_channels, num_layers,
                    apply_batchnorm):
    dims = [in_channels] + [hidden_channels] * (num_layers - 1) + [out_channels]
    params = []
    for li in range(num_layers):
        fin, fout = dims[li], dims[li + 1]
        key, kw, kb, kg, kbe, km, kv = jax.random.split(key, 7)
        w = jax.random.normal(kw, (fin, fout), jnp.float32) * (1.0 / jnp.sqrt(fin))
        b = jax.random.normal(kb, (fout,), jnp.float32) * 0.01
        layer = {"w": w, "b": b}
        if apply_batchnorm and li < num_layers - 1:
            layer["gamma"] = 1.0 + 0.1 * jax.random.normal(kg, (fout,), jnp.float32)
            layer["beta"] = 0.1 * jax.random.normal(kbe, (fout,), jnp.float32)
            layer["running_mean"] = 0.1 * jax.random.normal(km, (fout,), jnp.float32)
            layer["running_var"] = 1.0 + 0.1 * jax.random.uniform(kv, (fout,), jnp.float32)
        params.append(layer)
    return params


def make_normalized_adj(key, n_nodes, p_edge=0.1):
    a = (jax.random.uniform(key, (n_nodes, n_nodes)) < p_edge).astype(jnp.float32)
    a = jnp.maximum(a, a.T)
    a = jnp.minimum(a + jnp.eye(n_nodes, dtype=jnp.float32), 1.0)
    d_inv_sqrt = 1.0 / jnp.sqrt(a.sum(axis=1))
    return a * d_inv_sqrt[:, None] * d_inv_sqrt[None, :]


# ----------------------------- reference (plain JAX) ---------------------------
def gcn_forward_ref(params, x, adj, *, apply_batchnorm, eps=1e-5):
    num_layers = len(params)
    for li, layer in enumerate(params):
        is_last = li == num_layers - 1
        x = adj @ (x @ layer["w"]) + layer["b"]
        if apply_batchnorm and not is_last:
            x = (x - layer["running_mean"]) / jnp.sqrt(layer["running_var"] + eps)
            x = x * layer["gamma"] + layer["beta"]
        if not is_last:
            x = jnp.maximum(x, 0.0)
    return x


# ----------------------------------- main --------------------------------------
if __name__ == "__main__":
    IN_CHANNELS, HIDDEN_CHANNELS, OUT_CHANNELS = 32, 64, 16
    NUM_LAYERS, APPLY_BATCHNORM = 3, True

    key = jax.random.PRNGKey(0)
    k_params, k_x1, k_adj1, k_x2, k_adj2 = jax.random.split(key, 5)
    params = init_gcn_params(k_params, IN_CHANNELS, HIDDEN_CHANNELS, OUT_CHANNELS,
                             NUM_LAYERS, APPLY_BATCHNORM)

    def rel_err(a, b):
        return float(jnp.max(jnp.abs(a - b)) / (jnp.max(jnp.abs(b)) + 1e-8))

    # small graph -> fully-fused single pallas_call
    n1 = 128
    x1 = jax.random.normal(k_x1, (n1, IN_CHANNELS), jnp.float32)
    adj1 = make_normalized_adj(k_adj1, n1)
    ref1 = gcn_forward_ref(params, x1, adj1, apply_batchnorm=APPLY_BATCHNORM)
    out1 = jax.block_until_ready(
        gcn_forward_pallas(params, x1, adj1, apply_batchnorm=APPLY_BATCHNORM,
                           mode="fused"))
    assert out1.shape == (n1, OUT_CHANNELS)
    assert rel_err(out1, ref1) < 5e-2, "fused path mismatch vs reference (bf16 tol)"

    # larger (non-tile-aligned) graph -> tiled path, resident H + fused next-layer transform
    n2 = 320
    x2 = jax.random.normal(k_x2, (n2, IN_CHANNELS), jnp.float32)
    adj2 = make_normalized_adj(k_adj2, n2)
    ref2 = gcn_forward_ref(params, x2, adj2, apply_batchnorm=APPLY_BATCHNORM)
    out2 = jax.block_until_ready(
        gcn_forward_pallas(params, x2, adj2, apply_batchnorm=APPLY_BATCHNORM,
                           mode="tiled", tile_n=128, tile_k=128))
    assert out2.shape == (n2, OUT_CHANNELS)
    assert rel_err(out2, ref2) < 5e-2, "tiled (resident-H) path mismatch vs reference"

    # same graph, force the K-streamed H fallback path
    out3 = jax.block_until_ready(
        gcn_forward_pallas(params, x2, adj2, apply_batchnorm=APPLY_BATCHNORM,
                           mode="tiled", tile_n=128, tile_k=128, h_resident=False))
    assert rel_err(out3, ref2) < 5e-2, "tiled (streamed-H) path mismatch vs reference"

    print("KERNEL_OK")
</pallas_src>

<mosaic_0001>
module attributes {stable_mosaic.version = 11 : i64} {
  func.func @_gcn_fused_kernel(%arg0: i32, %arg1: memref<128x128xbf16, #tpu.memory_space<vmem>>, %arg2: memref<128x128xbf16, #tpu.memory_space<vmem>>, %arg3: memref<128x128xbf16, #tpu.memory_space<vmem>>, %arg4: memref<1x128xf32, #tpu.memory_space<vmem>>, %arg5: memref<128x128xbf16, #tpu.memory_space<vmem>>, %arg6: memref<1x128xf32, #tpu.memory_space<vmem>>, %arg7: memref<128x128xbf16, #tpu.memory_space<vmem>>, %arg8: memref<1x128xf32, #tpu.memory_space<vmem>>, %arg9: memref<128x128xf32, #tpu.memory_space<vmem>>) attributes {dimension_semantics = [#tpu.dimension_semantics<arbitrary>], iteration_bounds = array<i64: 1>, scalar_prefetch = 0 : i64, scratch_operands = 0 : i64, tpu.core_type = #tpu.core_type<tc>, window_params = [{pipeline_mode = #tpu.pipeline_mode<synchronous>, transform_indices = @transform_0, window_bounds = array<i64: 128, 128>}, {pipeline_mode = #tpu.pipeline_mode<synchronous>, transform_indices = @transform_1, window_bounds = array<i64: 128, 128>}, {pipeline_mode = #tpu.pipeline_mode<synchronous>, transform_indices = @transform_2, window_bounds = array<i64: 128, 128>}, {pipeline_mode = #tpu.pipeline_mode<synchronous>, transform_indices = @transform_3, window_bounds = array<i64: 1, 128>}, {pipeline_mode = #tpu.pipeline_mode<synchronous>, transform_indices = @transform_4, window_bounds = array<i64: 128, 128>}, {pipeline_mode = #tpu.pipeline_mode<synchronous>, transform_indices = @transform_5, window_bounds = array<i64: 1, 128>}, {pipeline_mode = #tpu.pipeline_mode<synchronous>, transform_indices = @transform_6, window_bounds = array<i64: 128, 128>}, {pipeline_mode = #tpu.pipeline_mode<synchronous>, transform_indices = @transform_7, window_bounds = array<i64: 1, 128>}, {pipeline_mode = #tpu.pipeline_mode<synchronous>, transform_indices = @transform_8, window_bounds = array<i64: 128, 128>}]} {
    %c0 = arith.constant 0 : index
    %c0_0 = arith.constant 0 : index
    %0 = vector.load %arg1[%c0, %c0_0] : memref<128x128xbf16, #tpu.memory_space<vmem>>, vector<128x128xbf16>
    %c0_1 = arith.constant 0 : index
    %c0_2 = arith.constant 0 : index
    %1 = vector.load %arg2[%c0_1, %c0_2] : memref<128x128xbf16, #tpu.memory_space<vmem>>, vector<128x128xbf16>
    %c0_3 = arith.constant 0 : index
    %c0_4 = arith.constant 0 : index
    %2 = vector.load %arg3[%c0_3, %c0_4] : memref<128x128xbf16, #tpu.memory_space<vmem>>, vector<128x128xbf16>
    %cst = arith.constant dense<0.000000e+00> : vector<128x128xf32>
    %3 = tpu.matmul %1, %2, %cst {dimension_numbers = #tpu.dot_dimension_numbers<[1], [0], [0], [1], [0, 0, 1, 1], [], []>} : vector<128x128xbf16>, vector<128x128xbf16>, vector<128x128xf32> -> vector<128x128xf32>
    %4 = arith.truncf %3 : vector<128x128xf32> to vector<128x128xbf16>
    %cst_5 = arith.constant dense<0.000000e+00> : vector<128x128xf32>
    %5 = tpu.matmul %0, %4, %cst_5 {dimension_numbers = #tpu.dot_dimension_numbers<[1], [0], [0], [1], [0, 0, 1, 1], [], []>} : vector<128x128xbf16>, vector<128x128xbf16>, vector<128x128xf32> -> vector<128x128xf32>
    %c0_6 = arith.constant 0 : index
    %c0_7 = arith.constant 0 : index
    %6 = vector.load %arg4[%c0_6, %c0_7] : memref<1x128xf32, #tpu.memory_space<vmem>>, vector<1x128xf32>
    %7 = vector.broadcast %6 : vector<1x128xf32> to vector<128x128xf32>
    %8 = arith.addf %5, %7 : vector<128x128xf32>
    %cst_8 = arith.constant 0.000000e+00 : f32
    %9 = vector.broadcast %cst_8 : f32 to vector<128x128xf32>
    %10 = arith.maximumf %8, %9 : vector<128x128xf32>
    %11 = arith.truncf %10 : vector<128x128xf32> to vector<128x128xbf16>
    %c0_9 = arith.constant 0 : index
    %c0_10 = arith.constant 0 : index
    %12 = vector.load %arg5[%c0_9, %c0_10] : memref<128x128xbf16, #tpu.memory_space<vmem>>, vector<128x128xbf16>
    %cst_11 = arith.constant dense<0.000000e+00> : vector<128x128xf32>
    %13 = tpu.matmul %11, %12, %cst_11 {dimension_numbers = #tpu.dot_dimension_numbers<[1], [0], [0], [1], [0, 0, 1, 1], [], []>} : vector<128x128xbf16>, vector<128x128xbf16>, vector<128x128xf32> -> vector<128x128xf32>
    %14 = arith.truncf %13 : vector<128x128xf32> to vector<128x128xbf16>
    %cst_12 = arith.constant dense<0.000000e+00> : vector<128x128xf32>
    %15 = tpu.matmul %0, %14, %cst_12 {dimension_numbers = #tpu.dot_dimension_numbers<[1], [0], [0], [1], [0, 0, 1, 1], [], []>} : vector<128x128xbf16>, vector<128x128xbf16>, vector<128x128xf32> -> vector<128x128xf32>
    %c0_13 = arith.constant 0 : index
    %c0_14 = arith.constant 0 : index
    %16 = vector.load %arg6[%c0_13, %c0_14] : memref<1x128xf32, #tpu.memory_space<vmem>>, vector<1x128xf32>
    %17 = vector.broadcast %16 : vector<1x128xf32> to vector<128x128xf32>
    %18 = arith.addf %15, %17 : vector<128x128xf32>
    %cst_15 = arith.constant 0.000000e+00 : f32
    %19 = vector.broadcast %cst_15 : f32 to vector<128x128xf32>
    %20 = arith.maximumf %18, %19 : vector<128x128xf32>
    %21 = arith.truncf %20 : vector<128x128xf32> to vector<128x128xbf16>
    %c0_16 = arith.constant 0 : index
    %c0_17 = arith.constant 0 : index
    %22 = vector.load %arg7[%c0_16, %c0_17] : memref<128x128xbf16, #tpu.memory_space<vmem>>, vector<128x128xbf16>
    %cst_18 = arith.constant dense<0.000000e+00> : vector<128x128xf32>
    %23 = tpu.matmul %21, %22, %cst_18 {dimension_numbers = #tpu.dot_dimension_numbers<[1], [0], [0], [1], [0, 0, 1, 1], [], []>} : vector<128x128xbf16>, vector<128x128xbf16>, vector<128x128xf32> -> vector<128x128xf32>
    %24 = arith.truncf %23 : vector<128x128xf32> to vector<128x128xbf16>
    %cst_19 = arith.constant dense<0.000000e+00> : vector<128x128xf32>
    %25 = tpu.matmul %0, %24, %cst_19 {dimension_numbers = #tpu.dot_dimension_numbers<[1], [0], [0], [1], [0, 0, 1, 1], [], []>} : vector<128x128xbf16>, vector<128x128xbf16>, vector<128x128xf32> -> vector<128x128xf32>
    %c0_20 = arith.constant 0 : index
    %c0_21 = arith.constant 0 : index
    %26 = vector.load %arg8[%c0_20, %c0_21] : memref<1x128xf32, #tpu.memory_space<vmem>>, vector<1x128xf32>
    %27 = vector.broadcast %26 : vector<1x128xf32> to vector<128x128xf32>
    %28 = arith.addf %25, %27 : vector<128x128xf32>
    %c0_22 = arith.constant 0 : index
    %c0_23 = arith.constant 0 : index
    %29 = vector.load %arg9[%c0_22, %c0_23] : memref<128x128xf32, #tpu.memory_space<vmem>>, vector<128x128xf32>
    tpu.vector_store %arg9[%c0_22, %c0_23], %28 {strides = array<i32>} : memref<128x128xf32, #tpu.memory_space<vmem>>, vector<128x128xf32>,
    return
  }
  func.func @transform_0(%arg0: i32) -> (i32, i32) {
    %c0_i32 = arith.constant 0 : i32
    %c0_i32_0 = arith.constant 0 : i32
    %c0_i32_1 = arith.constant 0 : i32
    return %c0_i32, %c0_i32_0 : i32, i32
  }
  func.func @transform_1(%arg0: i32) -> (i32, i32) {
    %c0_i32 = arith.constant 0 : i32
    %c0_i32_0 = arith.constant 0 : i32
    %c0_i32_1 = arith.constant 0 : i32
    return %c0_i32, %c0_i32_0 : i32, i32
  }
  func.func @transform_2(%arg0: i32) -> (i32, i32) {
    %c0_i32 = arith.constant 0 : i32
    %c0_i32_0 = arith.constant 0 : i32
    %c0_i32_1 = arith.constant 0 : i32
    return %c0_i32, %c0_i32_0 : i32, i32
  }
  func.func @transform_3(%arg0: i32) -> (i32, i32) {
    %c0_i32 = arith.constant 0 : i32
    %c0_i32_0 = arith.constant 0 : i32
    %c0_i32_1 = arith.constant 0 : i32
    return %c0_i32, %c0_i32_0 : i32, i32
  }
  func.func @transform_4(%arg0: i32) -> (i32, i32) {
    %c0_i32 = arith.constant 0 : i32
    %c0_i32_0 = arith.constant 0 : i32
    %c0_i32_1 = arith.constant 0 : i32
    return %c0_i32, %c0_i32_0 : i32, i32
  }
  func.func @transform_5(%arg0: i32) -> (i32, i32) {
    %c0_i32 = arith.constant 0 : i32
    %c0_i32_0 = arith.constant 0 : i32
    %c0_i32_1 = arith.constant 0 : i32
    return %c0_i32, %c0_i32_0 : i32, i32
  }
  func.func @transform_6(%arg0: i32) -> (i32, i32) {
    %c0_i32 = arith.constant 0 : i32
    %c0_i32_0 = arith.constant 0 : i32
    %c0_i32_1 = arith.constant 0 : i32
    return %c0_i32, %c0_i32_0 : i32, i32
  }
  func.func @transform_7(%arg0: i32) -> (i32, i32) {
    %c0_i32 = arith.constant 0 : i32
    %c0_i32_0 = arith.constant 0 : i32
    %c0_i32_1 = arith.constant 0 : i32
    return %c0_i32, %c0_i32_0 : i32, i32
  }
  func.func @transform_8(%arg0: i32) -> (i32, i32) {
    %c0_i32 = arith.constant 0 : i32
    %c0_i32_0 = arith.constant 0 : i32
    %c0_i32_1 = arith.constant 0 : i32
    return %c0_i32, %c0_i32_0 : i32, i32
  }
}

</mosaic_0001>

<llo_original>
// kernel: tpu_custom_call.1
$region0: #{tpu_custom_call.1}
  #allocation0 [shape = 'u32[]', space=smem, size = 0x4, offset = 0x4, fixed_abs, tag = 'smem constant byte address 0x4 - core index']
  #allocation1 [shape = 'u32[144,128]{1,0:T(1,128)}', space=vmem, size = 0x12000, scoped, tag = 'internal scratch']
  %s0 = inlined_call_operand.hbm [shape: bf16[128,128], index: 0, kind: input, shape index: {}]
  %s1 = inlined_call_operand.hbm [shape: bf16[128,128], index: 1, kind: input, shape index: {}]
  %s2 = inlined_call_operand.hbm [shape: bf16[128,128], index: 2, kind: input, shape index: {}]
  %s3 = inlined_call_operand.vmem [shape: f32[1,128], index: 3, kind: input, shape index: {}]
  %s4 = inlined_call_operand.hbm [shape: bf16[128,128], index: 4, kind: input, shape index: {}]
  %s5 = inlined_call_operand.vmem [shape: f32[1,128], index: 5, kind: input, shape index: {}]
  %s6 = inlined_call_operand.hbm [shape: bf16[128,128], index: 6, kind: input, shape index: {}]
  %s7 = inlined_call_operand.vmem [shape: f32[1,128], index: 7, kind: input, shape index: {}]
  %s8 = inlined_call_operand.hbm [shape: f32[128,128], index: 8, kind: output, shape index: {}]
  %s9 = sld [smem:[#allocation0]]
  $region62: #{tpu_custom_call.1} parent=0
    _
  %s11 = ssub.s32 1, %s9
  %s12 = scalar_select 0, %s11, %s9
  $region1: #{tpu_custom_call.1} parent=0
    #allocation2 [shape = 'u8[32768]{0}', space=vmem, size = 0x8000, scoped, tag = 'input window, operand 0, single buffered']
    #allocation3 [shape = 's32[1]{0}', space=sflag, size = 0x4, scoped, tag = 'scoped memory for tpu_custom_call.1']
    #allocation4 [shape = 's32[1]{0}', space=sflag, size = 0x4, scoped, tag = 'scoped memory for tpu_custom_call.1']
    #allocation5 [shape = 'u8[32768]{0}', space=vmem, size = 0x8000, scoped, tag = 'input window, operand 1, single buffered']
    #allocation6 [shape = 's32[1]{0}', space=sflag, size = 0x4, scoped, tag = 'scoped memory for tpu_custom_call.1']
    #allocation7 [shape = 'u8[32768]{0}', space=vmem, size = 0x8000, scoped, tag = 'input window, operand 2, single buffered']
    #allocation8 [shape = 'u8[32768]{0}', space=vmem, size = 0x8000, scoped, tag = 'input window, operand 4, single buffered']
    #allocation9 [shape = 's32[1]{0}', space=sflag, size = 0x4, scoped, tag = 'scoped memory for tpu_custom_call.1']
    #allocation10 [shape = 'u8[32768]{0}', space=vmem, size = 0x8000, scoped, tag = 'input window, operand 6, single buffered']
    #allocation11 [shape = 'u8[65536]{0}', space=vmem, size = 0x10000, scoped, tag = 'output window, operand 0, single buffered']
    %13 = vsyncpa [#allocation3], 0
    %14 = vsyncpa [#allocation6], 0
    %15 = vsyncpa [#allocation9], 0
    %16 = vsyncpa [#allocation4], 0
    // Predicated region
    $region2: #{tpu_custom_call.1} parent=1 // pred_check
      _
    $region3: #{tpu_custom_call.1} parent=1 // pred_check_branch
      %18 = sbr.rel (0) target = $region5
    $region4: #{tpu_custom_call.1} parent=1 // pred_region
      %s20 = ssub.s32 1024, 1024
      %21 = vsyncadd [#allocation3], %s20
      %s22 = sshll.u32 [#allocation2], 4
      %s23 = int_to_ptr.vmem [resolvable:$true] %s22
      %28 = dma.hbm_to_vmem [thread:$0]  %s0, 1024, %s23, [#allocation3], 64, 64, 4
    $region5: #{tpu_custom_call.1} parent=1 // pred_fallthru
      _
    // Predicated region
    $region6: #{tpu_custom_call.1} parent=1 // pred_check
      _
    $region7: #{tpu_custom_call.1} parent=1 // pred_check_branch
      %30 = sbr.rel (0) target = $region9
    $region8: #{tpu_custom_call.1} parent=1 // pred_region
      %s32 = ssub.s32 1024, 1024
      %33 = vsyncadd [#allocation6], %s32
      %s34 = sshll.u32 [#allocation5], 4
      %s35 = int_to_ptr.vmem [resolvable:$true] %s34
      %40 = dma.hbm_to_vmem [thread:$0]  %s1, 1024, %s35, [#allocation6], 64, 64, 4
    $region9: #{tpu_custom_call.1} parent=1 // pred_fallthru
      _
    // Predicated region
    $region10: #{tpu_custom_call.1} parent=1 // pred_check
      _
    $region11: #{tpu_custom_call.1} parent=1 // pred_check_branch
      %42 = sbr.rel (0) target = $region13
    $region12: #{tpu_custom_call.1} parent=1 // pred_region
      %s44 = ssub.s32 1024, 1024
      %45 = vsyncadd [#allocation6], %s44
      %s46 = sshll.u32 [#allocation7], 4
      %s47 = int_to_ptr.vmem [resolvable:$true] %s46
      %52 = dma.hbm_to_vmem [thread:$0]  %s2, 1024, %s47, [#allocation6], 64, 64, 4
    $region13: #{tpu_custom_call.1} parent=1 // pred_fallthru
      _
    // Predicated region
    $region14: #{tpu_custom_call.1} parent=1 // pred_check
      _
    $region15: #{tpu_custom_call.1} parent=1 // pred_check_branch
      %54 = sbr.rel (0) target = $region17
    $region16: #{tpu_custom_call.1} parent=1 // pred_region
      _
    $region17: #{tpu_custom_call.1} parent=1 // pred_fallthru
      _
    // Predicated region
    $region18: #{tpu_custom_call.1} parent=1 // pred_check
      _
    $region19: #{tpu_custom_call.1} parent=1 // pred_check_branch
      %56 = sbr.rel (0) target = $region21
    $region20: #{tpu_custom_call.1} parent=1 // pred_region
      %s58 = ssub.s32 1024, 1024
      %59 = vsyncadd [#allocation9], %s58
      %s60 = sshll.u32 [#allocation8], 4
      %s61 = int_to_ptr.vmem [resolvable:$true] %s60
      %66 = dma.hbm_to_vmem [thread:$0]  %s4, 1024, %s61, [#allocation9], 64, 64, 4
    $region21: #{tpu_custom_call.1} parent=1 // pred_fallthru
      _
    // Predicated region
    $region22: #{tpu_custom_call.1} parent=1 // pred_check
      _
    $region23: #{tpu_custom_call.1} parent=1 // pred_check_branch
      %68 = sbr.rel (0) target = $region25
    $region24: #{tpu_custom_call.1} parent=1 // pred_region
      _
    $region25: #{tpu_custom_call.1} parent=1 // pred_fallthru
      _
    // Predicated region
    $region26: #{tpu_custom_call.1} parent=1 // pred_check
      _
    $region27: #{tpu_custom_call.1} parent=1 // pred_check_branch
      %70 = sbr.rel (0) target = $region29
    $region28: #{tpu_custom_call.1} parent=1 // pred_region
      %s72 = ssub.s32 1024, 1024
      %73 = vsyncadd [#allocation9], %s72
      %s74 = sshll.u32 [#allocation10], 4
      %s75 = int_to_ptr.vmem [resolvable:$true] %s74
      %80 = dma.hbm_to_vmem [thread:$0]  %s6, 1024, %s75, [#allocation9], 64, 64, 4
    $region29: #{tpu_custom_call.1} parent=1 // pred_fallthru
      _
    // Predicated region
    $region30: #{tpu_custom_call.1} parent=1 // pred_check
      _
    $region31: #{tpu_custom_call.1} parent=1 // pred_check_branch
      %82 = sbr.rel (0) target = $region33
    $region32: #{tpu_custom_call.1} parent=1 // pred_region
      _
    $region33: #{tpu_custom_call.1} parent=1 // pred_fallthru
      _
    // Predicated region
    $region34: #{tpu_custom_call.1} parent=1 // pred_check
      _
    $region35: #{tpu_custom_call.1} parent=1 // pred_check_branch
      %84 = sbr.rel (0) target = $region37
    $region36: #{tpu_custom_call.1} parent=1 // pred_region
      %85 = dma.done [#allocation3], 1024
    $region37: #{tpu_custom_call.1} parent=1 // pred_fallthru
      _
    // Predicated region
    $region38: #{tpu_custom_call.1} parent=1 // pred_check
      _
    $region39: #{tpu_custom_call.1} parent=1 // pred_check_branch
      %87 = sbr.rel (0) target = $region41
    $region40: #{tpu_custom_call.1} parent=1 // pred_region
      %88 = dma.done [#allocation6], 1024
    $region41: #{tpu_custom_call.1} parent=1 // pred_fallthru
      _
    // Predicated region
    $region42: #{tpu_custom_call.1} parent=1 // pred_check
      _
    $region43: #{tpu_custom_call.1} parent=1 // pred_check_branch
      %90 = sbr.rel (0) target = $region45
    $region44: #{tpu_custom_call.1} parent=1 // pred_region
      %91 = dma.done [#allocation6], 1024
    $region45: #{tpu_custom_call.1} parent=1 // pred_fallthru
      _
    // Predicated region
    $region46: #{tpu_custom_call.1} parent=1 // pred_check
      _
    $region47: #{tpu_custom_call.1} parent=1 // pred_check_branch
      %93 = sbr.rel (0) target = $region49
    $region48: #{tpu_custom_call.1} parent=1 // pred_region
      %94 = dma.done [#allocation9], 1024
    $region49: #{tpu_custom_call.1} parent=1 // pred_fallthru
      _
    // Predicated region
    $region50: #{tpu_custom_call.1} parent=1 // pred_check
      _
    $region51: #{tpu_custom_call.1} parent=1 // pred_check_branch
      %96 = sbr.rel (0) target = $region53
    $region52: #{tpu_custom_call.1} parent=1 // pred_region
      %97 = dma.done [#allocation9], 1024
    $region53: #{tpu_custom_call.1} parent=1 // pred_fallthru
      _
    %v99 = vld [vmem:[#allocation2] sm:$0xf]
    %v100 = vld [vmem:[#allocation2 + $0x4] sm:$0xf]
    %v101 = vld [vmem:[#allocation2 + $0x8] sm:$0xf]
    %v102 = vld [vmem:[#allocation2 + $0xc] sm:$0xf]
    %v103 = vld [vmem:[#allocation2 + $0x10] sm:$0xf]
    %v104 = vld [vmem:[#allocation2 + $0x14] sm:$0xf]
    %v105 = vld [vmem:[#allocation2 + $0x18] sm:$0xf]
    %v106 = vld [vmem:[#allocation2 + $0x1c] sm:$0xf]
    %v107 = vld [vmem:[#allocation2 + $0x20] sm:$0xf]
    %v108 = vld [vmem:[#allocation2 + $0x24] sm:$0xf]
    %v109 = vld [vmem:[#allocation2 + $0x28] sm:$0xf]
    %v110 = vld [vmem:[#allocation2 + $0x2c] sm:$0xf]
    %v111 = vld [vmem:[#allocation2 + $0x30] sm:$0xf]
    %v112 = vld [vmem:[#allocation2 + $0x34] sm:$0xf]
    %v113 = vld [vmem:[#allocation2 + $0x38] sm:$0xf]
    %v114 = vld [vmem:[#allocation2 + $0x3c] sm:$0xf]
    %v115 = vld [vmem:[#allocation5] sm:$0xf]
    %v116 = vld [vmem:[#allocation5 + $0x4] sm:$0xf]
    %v117 = vld [vmem:[#allocation5 + $0x8] sm:$0xf]
    %v118 = vld [vmem:[#allocation5 + $0xc] sm:$0xf]
    %v119 = vld [vmem:[#allocation5 + $0x10] sm:$0xf]
    %v120 = vld [vmem:[#allocation5 + $0x14] sm:$0xf]
    %v121 = vld [vmem:[#allocation5 + $0x18] sm:$0xf]
    %v122 = vld [vmem:[#allocation5 + $0x1c] sm:$0xf]
    %v123 = vld [vmem:[#allocation5 + $0x20] sm:$0xf]
    %v124 = vld [vmem:[#allocation5 + $0x24] sm:$0xf]
    %v125 = vld [vmem:[#allocation5 + $0x28] sm:$0xf]
    %v126 = vld [vmem:[#allocation5 + $0x2c] sm:$0xf]
    %v127 = vld [vmem:[#allocation5 + $0x30] sm:$0xf]
    %v128 = vld [vmem:[#allocation5 + $0x34] sm:$0xf]
    %v129 = vld [vmem:[#allocation5 + $0x38] sm:$0xf]
    %v130 = vld [vmem:[#allocation5 + $0x3c] sm:$0xf]
    %v131 = vld [vmem:[#allocation7] sm:$0xf]
    %v132 = vld [vmem:[#allocation7 + $0x4] sm:$0xf]
    %v133 = vld [vmem:[#allocation7 + $0x8] sm:$0xf]
    %v134 = vld [vmem:[#allocation7 + $0xc] sm:$0xf]
    %v135 = vld [vmem:[#allocation7 + $0x10] sm:$0xf]
    %v136 = vld [vmem:[#allocation7 + $0x14] sm:$0xf]
    %v137 = vld [vmem:[#allocation7 + $0x18] sm:$0xf]
    %v138 = vld [vmem:[#allocation7 + $0x1c] sm:$0xf]
    %v139 = vld [vmem:[#allocation7 + $0x20] sm:$0xf]
    %v140 = vld [vmem:[#allocation7 + $0x24] sm:$0xf]
    %v141 = vld [vmem:[#allocation7 + $0x28] sm:$0xf]
    %v142 = vld [vmem:[#allocation7 + $0x2c] sm:$0xf]
    %v143 = vld [vmem:[#allocation7 + $0x30] sm:$0xf]
    %v144 = vld [vmem:[#allocation7 + $0x34] sm:$0xf]
    %v145 = vld [vmem:[#allocation7 + $0x38] sm:$0xf]
    %v146 = vld [vmem:[#allocation7 + $0x3c] sm:$0xf]
    %v163 = vunpack.c.l.b16 %v115
    %v164 = vunpack.c.l.b16 %v116
    %v165 = vunpack.c.l.b16 %v117
    %v166 = vunpack.c.l.b16 %v118
    %v167 = vunpack.c.l.b16 %v119
    %v168 = vunpack.c.l.b16 %v120
    %v169 = vunpack.c.l.b16 %v121
    %v170 = vunpack.c.l.b16 %v122
    %v171 = vunpack.c.l.b16 %v123
    %v172 = vunpack.c.l.b16 %v124
    %v173 = vunpack.c.l.b16 %v125
    %v174 = vunpack.c.l.b16 %v126
    %v175 = vunpack.c.l.b16 %v127
    %v176 = vunpack.c.l.b16 %v128
    %v177 = vunpack.c.l.b16 %v129
    %v178 = vunpack.c.l.b16 %v130
    %v179 = vpack.c.b16 %v164, %v163
    %v180 = vpack.c.b16 %v166, %v165
    %v181 = vpack.c.b16 %v168, %v167
    %v182 = vpack.c.b16 %v170, %v169
    %v183 = vpack.c.b16 %v172, %v171
    %v184 = vpack.c.b16 %v174, %v173
    %v185 = vpack.c.b16 %v176, %v175
    %v186 = vpack.c.b16 %v178, %v177
    %v211 = vunpack.c.l.b16 %v131
    %v212 = vunpack.c.l.b16 %v132
    %v213 = vunpack.c.l.b16 %v133
    %v214 = vunpack.c.l.b16 %v134
    %v215 = vunpack.c.l.b16 %v135
    %v216 = vunpack.c.l.b16 %v136
    %v217 = vunpack.c.l.b16 %v137
    %v218 = vunpack.c.l.b16 %v138
    %v219 = vunpack.c.l.b16 %v139
    %v220 = vunpack.c.l.b16 %v140
    %v221 = vunpack.c.l.b16 %v141
    %v222 = vunpack.c.l.b16 %v142
    %v223 = vunpack.c.l.b16 %v143
    %v224 = vunpack.c.l.b16 %v144
    %v225 = vunpack.c.l.b16 %v145
    %v226 = vunpack.c.l.b16 %v146
    %v227 = vpack.c.b16 %v212, %v211
    %v228 = vpack.c.b16 %v214, %v213
    %v229 = vpack.c.b16 %v216, %v215
    %v230 = vpack.c.b16 %v218, %v217
    %v231 = vpack.c.b16 %v220, %v219
    %v232 = vpack.c.b16 %v222, %v221
    %v233 = vpack.c.b16 %v224, %v223
    %v234 = vpack.c.b16 %v226, %v225
    %243 = vmatprep.subr.bf16.mxu0 0
    %244 = vmatpush1.bf16.msra.mxu0 %v234
    %245 = vmatprep.subr.bf16.mxu0 0
    %246 = vmatpush1.bf16.msra.mxu0 %v233
    %247 = vmatprep.subr.bf16.mxu0 0
    %248 = vmatpush1.bf16.msra.mxu0 %v232
    %249 = vmatprep.subr.bf16.mxu0 0
    %250 = vmatpush1.bf16.msra.mxu0 %v231
    %251 = vmatprep.subr.bf16.mxu0 0
    %252 = vmatpush1.bf16.msra.mxu0 %v230
    %253 = vmatprep.subr.bf16.mxu0 0
    %254 = vmatpush1.bf16.msra.mxu0 %v229
    %255 = vmatprep.subr.bf16.mxu0 0
    %256 = vmatpush1.bf16.msra.mxu0 %v228
    %257 = vmatprep.subr.bf16.mxu0 0
    %258 = vmatpush1.bf16.msra.mxu0 %v227
    %259 = vmatprep.subr.bf16.mxu0 0
    %260 = vmatpush2.bf16.msra.mxu0 0
    %261 = vmatprep.subr.bf16.mxu0 0
    %262 = vmatpush2.bf16.msra.mxu0 0
    %263 = vmatprep.subr.bf16.mxu0 0
    %264 = vmatpush2.bf16.msra.mxu0 0
    %265 = vmatprep.subr.bf16.mxu0 0
    %266 = vmatpush2.bf16.msra.mxu0 0
    %267 = vmatprep.subr.bf16.mxu0 0
    %268 = vmatpush2.bf16.msra.mxu0 0
    %269 = vmatprep.subr.bf16.mxu0 0
    %270 = vmatpush2.bf16.msra.mxu0 0
    %271 = vmatprep.subr.bf16.mxu0 0
    %272 = vmatpush2.bf16.msra.mxu0 0
    %273 = vmatprep.subr.bf16.mxu0 0
    %274 = vmatpush2.bf16.msra.mxu0 0
    %275 = vmatprep.mubr.bf16.mxu0 0
    %276 = vmatmul.mubr.bf16.gmra.mxu0 %v179
    %v277 = vpop.f32.mrf.mxu0
    %v278 = vadd.f32 0.0, %v277
    %v279 = vpop.f32.mrf.mxu0
    %v280 = vpop.f32.mrf.mxu0
    %v281 = vadd.f32 0.0, %v280
    %v282 = vpop.f32.mrf.mxu0
    %283 = vmatprep.mubr.bf16.mxu0 0
    %284 = vmatmul.mubr.bf16.gmra.mxu0 %v180
    %v285 = vpop.f32.mrf.mxu0
    %v286 = vadd.f32 0.0, %v285
    %v287 = vpop.f32.mrf.mxu0
    %v288 = vpop.f32.mrf.mxu0
    %v289 = vadd.f32 0.0, %v288
    %v290 = vpop.f32.mrf.mxu0
    %291 = vmatprep.mubr.bf16.mxu0 0
    %292 = vmatmul.mubr.bf16.gmra.mxu0 %v181
    %v293 = vpop.f32.mrf.mxu0
    %v294 = vadd.f32 0.0, %v293
    %v295 = vpop.f32.mrf.mxu0
    %v296 = vpop.f32.mrf.mxu0
    %v297 = vadd.f32 0.0, %v296
    %v298 = vpop.f32.mrf.mxu0
    %299 = vmatprep.mubr.bf16.mxu0 0
    %300 = vmatmul.mubr.bf16.gmra.mxu0 %v182
    %v301 = vpop.f32.mrf.mxu0
    %v302 = vadd.f32 0.0, %v301
    %v303 = vpop.f32.mrf.mxu0
    %v304 = vpop.f32.mrf.mxu0
    %v305 = vadd.f32 0.0, %v304
    %v306 = vpop.f32.mrf.mxu0
    %307 = vmatprep.mubr.bf16.mxu0 0
    %308 = vmatmul.mubr.bf16.gmra.mxu0 %v183
    %v309 = vpop.f32.mrf.mxu0
    %v310 = vadd.f32 0.0, %v309
    %v311 = vpop.f32.mrf.mxu0
    %v312 = vpop.f32.mrf.mxu0
    %v313 = vadd.f32 0.0, %v312
    %v314 = vpop.f32.mrf.mxu0
    %315 = vmatprep.mubr.bf16.mxu0 0
    %316 = vmatmul.mubr.bf16.gmra.mxu0 %v184
    %v317 = vpop.f32.mrf.mxu0
    %v318 = vadd.f32 0.0, %v317
    %v319 = vpop.f32.mrf.mxu0
    %v320 = vpop.f32.mrf.mxu0
    %v321 = vadd.f32 0.0, %v320
    %v322 = vpop.f32.mrf.mxu0
    %323 = vmatprep.mubr.bf16.mxu0 0
    %324 = vmatmul.mubr.bf16.gmra.mxu0 %v185
    %v325 = vpop.f32.mrf.mxu0
    %v326 = vadd.f32 0.0, %v325
    %v327 = vpop.f32.mrf.mxu0
    %v328 = vpop.f32.mrf.mxu0
    %v329 = vadd.f32 0.0, %v328
    %v330 = vpop.f32.mrf.mxu0
    %331 = vmatprep.mubr.bf16.mxu0 0
    %332 = vmatmul.mubr.bf16.gmra.mxu0 %v186
    %v333 = vpop.f32.mrf.mxu0
    %v334 = vadd.f32 0.0, %v333
    %v335 = vpop.f32.mrf.mxu0
    %v336 = vpop.f32.mrf.mxu0
    %v337 = vadd.f32 0.0, %v336
    %v338 = vpop.f32.mrf.mxu0
    %339 = vdwg.mxu0
    %v340 = vpack.c.bf16 %v281, %v278
    %v341 = vpack.c.bf16 %v289, %v286
    %v342 = vpack.c.bf16 %v297, %v294
    %v343 = vpack.c.bf16 %v305, %v302
    %v344 = vpack.c.bf16 %v313, %v310
    %v345 = vpack.c.bf16 %v321, %v318
    %v346 = vpack.c.bf16 %v329, %v326
    %v347 = vpack.c.bf16 %v337, %v334
    %v348 = vld [vmem:[%s3] sm:$0x1]
    %v350 = vlaneseq
    %v351 = vshrl.u32 %v350, 7
    %v352 = vsub.s32 0, %v351
    %v353 = vrot.slane %v348, %v352
    %v371 = vunpack.c.l.b16 %v99
    %v372 = vunpack.c.l.b16 %v100
    %v373 = vunpack.c.l.b16 %v101
    %v374 = vunpack.c.l.b16 %v102
    %v375 = vunpack.c.l.b16 %v103
    %v376 = vunpack.c.l.b16 %v104
    %v377 = vunpack.c.l.b16 %v105
    %v378 = vunpack.c.l.b16 %v106
    %v379 = vunpack.c.l.b16 %v107
    %v380 = vunpack.c.l.b16 %v108
    %v381 = vunpack.c.l.b16 %v109
    %v382 = vunpack.c.l.b16 %v110
    %v383 = vunpack.c.l.b16 %v111
    %v384 = vunpack.c.l.b16 %v112
    %v385 = vunpack.c.l.b16 %v113
    %v386 = vunpack.c.l.b16 %v114
    %v387 = vpack.c.b16 %v372, %v371
    %v388 = vpack.c.b16 %v374, %v373
    %v389 = vpack.c.b16 %v376, %v375
    %v390 = vpack.c.b16 %v378, %v377
    %v391 = vpack.c.b16 %v380, %v379
    %v392 = vpack.c.b16 %v382, %v381
    %v393 = vpack.c.b16 %v384, %v383
    %v394 = vpack.c.b16 %v386, %v385
    %403 = vmatprep.subr.bf16.mxu0 0
    %404 = vmatpush1.bf16.msra.mxu0 %v347
    %405 = vmatprep.subr.bf16.mxu0 0
    %406 = vmatpush1.bf16.msra.mxu0 %v346
    %407 = vmatprep.subr.bf16.mxu0 0
    %408 = vmatpush1.bf16.msra.mxu0 %v345
    %409 = vmatprep.subr.bf16.mxu0 0
    %410 = vmatpush1.bf16.msra.mxu0 %v344
    %411 = vmatprep.subr.bf16.mxu0 0
    %412 = vmatpush1.bf16.msra.mxu0 %v343
    %413 = vmatprep.subr.bf16.mxu0 0
    %414 = vmatpush1.bf16.msra.mxu0 %v342
    %415 = vmatprep.subr.bf16.mxu0 0
    %416 = vmatpush1.bf16.msra.mxu0 %v341
    %417 = vmatprep.subr.bf16.mxu0 0
    %418 = vmatpush1.bf16.msra.mxu0 %v340
    %419 = vmatprep.subr.bf16.mxu0 0
    %420 = vmatpush2.bf16.msra.mxu0 0
    %421 = vmatprep.subr.bf16.mxu0 0
    %422 = vmatpush2.bf16.msra.mxu0 0
    %423 = vmatprep.subr.bf16.mxu0 0
    %424 = vmatpush2.bf16.msra.mxu0 0
    %425 = vmatprep.subr.bf16.mxu0 0
    %426 = vmatpush2.bf16.msra.mxu0 0
    %427 = vmatprep.subr.bf16.mxu0 0
    %428 = vmatpush2.bf16.msra.mxu0 0
    %429 = vmatprep.subr.bf16.mxu0 0
    %430 = vmatpush2.bf16.msra.mxu0 0
    %431 = vmatprep.subr.bf16.mxu0 0
    %432 = vmatpush2.bf16.msra.mxu0 0
    %433 = vmatprep.subr.bf16.mxu0 0
    %434 = vmatpush2.bf16.msra.mxu0 0
    %435 = vmatprep.mubr.bf16.mxu0 0
    %436 = vmatmul.mubr.bf16.gmra.mxu0 %v387
    %v437 = vpop.f32.mrf.mxu0
    %v438 = vadd.f32 %v353, %v437
    %v439 = vpop.f32.mrf.mxu0
    %v440 = vpop.f32.mrf.mxu0
    %v441 = vadd.f32 %v353, %v440
    %v442 = vpop.f32.mrf.mxu0
    %443 = vmatprep.mubr.bf16.mxu0 0
    %444 = vmatmul.mubr.bf16.gmra.mxu0 %v388
    %v445 = vpop.f32.mrf.mxu0
    %v446 = vadd.f32 %v353, %v445
    %v447 = vpop.f32.mrf.mxu0
    %v448 = vpop.f32.mrf.mxu0
    %v449 = vadd.f32 %v353, %v448
    %v450 = vpop.f32.mrf.mxu0
    %451 = vmatprep.mubr.bf16.mxu0 0
    %452 = vmatmul.mubr.bf16.gmra.mxu0 %v389
    %v453 = vpop.f32.mrf.mxu0
    %v454 = vadd.f32 %v353, %v453
    %v455 = vpop.f32.mrf.mxu0
    %v456 = vpop.f32.mrf.mxu0
    %v457 = vadd.f32 %v353, %v456
    %v458 = vpop.f32.mrf.mxu0
    %459 = vmatprep.mubr.bf16.mxu0 0
    %460 = vmatmul.mubr.bf16.gmra.mxu0 %v390
    %v461 = vpop.f32.mrf.mxu0
    %v462 = vadd.f32 %v353, %v461
    %v463 = vpop.f32.mrf.mxu0
    %v464 = vpop.f32.mrf.mxu0
    %v465 = vadd.f32 %v353, %v464
    %v466 = vpop.f32.mrf.mxu0
    %467 = vmatprep.mubr.bf16.mxu0 0
    %468 = vmatmul.mubr.bf16.gmra.mxu0 %v391
    %v469 = vpop.f32.mrf.mxu0
    %v470 = vadd.f32 %v353, %v469
    %v471 = vpop.f32.mrf.mxu0
    %v472 = vpop.f32.mrf.mxu0
    %v473 = vadd.f32 %v353, %v472
    %v474 = vpop.f32.mrf.mxu0
    %475 = vmatprep.mubr.bf16.mxu0 0
    %476 = vmatmul.mubr.bf16.gmra.mxu0 %v392
    %v477 = vpop.f32.mrf.mxu0
    %v478 = vadd.f32 %v353, %v477
    %v479 = vpop.f32.mrf.mxu0
    %v480 = vpop.f32.mrf.mxu0
    %v481 = vadd.f32 %v353, %v480
    %v482 = vpop.f32.mrf.mxu0
    %483 = vmatprep.mubr.bf16.mxu0 0
    %484 = vmatmul.mubr.bf16.gmra.mxu0 %v393
    %v485 = vpop.f32.mrf.mxu0
    %v486 = vadd.f32 %v353, %v485
    %v487 = vpop.f32.mrf.mxu0
    %v488 = vpop.f32.mrf.mxu0
    %v489 = vadd.f32 %v353, %v488
    %v490 = vpop.f32.mrf.mxu0
    %491 = vmatprep.mubr.bf16.mxu0 0
    %492 = vmatmul.mubr.bf16.gmra.mxu0 %v394
    %v493 = vpop.f32.mrf.mxu0
    %v494 = vadd.f32 %v353, %v493
    %v495 = vpop.f32.mrf.mxu0
    %v496 = vpop.f32.mrf.mxu0
    %v497 = vadd.f32 %v353, %v496
    %v498 = vpop.f32.mrf.mxu0
    %499 = vdwg.mxu0
    %v500 = vmax.f32 %v438, 0.0
    %v501 = vmax.f32 %v441, 0.0
    %v502 = vmax.f32 %v446, 0.0
    %v503 = vmax.f32 %v449, 0.0
    %v504 = vmax.f32 %v454, 0.0
    %v505 = vmax.f32 %v457, 0.0
    %v506 = vmax.f32 %v462, 0.0
    %v507 = vmax.f32 %v465, 0.0
    %v508 = vmax.f32 %v470, 0.0
    %v509 = vmax.f32 %v473, 0.0
    %v510 = vmax.f32 %v478, 0.0
    %v511 = vmax.f32 %v481, 0.0
    %v512 = vmax.f32 %v486, 0.0
    %v513 = vmax.f32 %v489, 0.0
    %v514 = vmax.f32 %v494, 0.0
    %v515 = vmax.f32 %v497, 0.0
    %v516 = vpack.c.bf16 %v501, %v500
    %v517 = vpack.c.bf16 %v503, %v502
    %v518 = vpack.c.bf16 %v505, %v504
    %v519 = vpack.c.bf16 %v507, %v506
    %v520 = vpack.c.bf16 %v509, %v508
    %v521 = vpack.c.bf16 %v511, %v510
    %v522 = vpack.c.bf16 %v513, %v512
    %v523 = vpack.c.bf16 %v515, %v514
    %v524 = vld [vmem:[#allocation8] sm:$0xf]
    %v525 = vld [vmem:[#allocation8 + $0x4] sm:$0xf]
    %v526 = vld [vmem:[#allocation8 + $0x8] sm:$0xf]
    %v527 = vld [vmem:[#allocation8 + $0xc] sm:$0xf]
    %v528 = vld [vmem:[#allocation8 + $0x10] sm:$0xf]
    %v529 = vld [vmem:[#allocation8 + $0x14] sm:$0xf]
    %v530 = vld [vmem:[#allocation8 + $0x18] sm:$0xf]
    %v531 = vld [vmem:[#allocation8 + $0x1c] sm:$0xf]
    %v532 = vld [vmem:[#allocation8 + $0x20] sm:$0xf]
    %v533 = vld [vmem:[#allocation8 + $0x24] sm:$0xf]
    %v534 = vld [vmem:[#allocation8 + $0x28] sm:$0xf]
    %v535 = vld [vmem:[#allocation8 + $0x2c] sm:$0xf]
    %v536 = vld [vmem:[#allocation8 + $0x30] sm:$0xf]
    %v537 = vld [vmem:[#allocation8 + $0x34] sm:$0xf]
    %v538 = vld [vmem:[#allocation8 + $0x38] sm:$0xf]
    %v539 = vld [vmem:[#allocation8 + $0x3c] sm:$0xf]
    %v556 = vunpack.c.l.b16 %v524
    %v557 = vunpack.c.l.b16 %v525
    %v558 = vunpack.c.l.b16 %v526
    %v559 = vunpack.c.l.b16 %v527
    %v560 = vunpack.c.l.b16 %v528
    %v561 = vunpack.c.l.b16 %v529
    %v562 = vunpack.c.l.b16 %v530
    %v563 = vunpack.c.l.b16 %v531
    %v564 = vunpack.c.l.b16 %v532
    %v565 = vunpack.c.l.b16 %v533
    %v566 = vunpack.c.l.b16 %v534
    %v567 = vunpack.c.l.b16 %v535
    %v568 = vunpack.c.l.b16 %v536
    %v569 = vunpack.c.l.b16 %v537
    %v570 = vunpack.c.l.b16 %v538
    %v571 = vunpack.c.l.b16 %v539
    %v572 = vpack.c.b16 %v557, %v556
    %v573 = vpack.c.b16 %v559, %v558
    %v574 = vpack.c.b16 %v561, %v560
    %v575 = vpack.c.b16 %v563, %v562
    %v576 = vpack.c.b16 %v565, %v564
    %v577 = vpack.c.b16 %v567, %v566
    %v578 = vpack.c.b16 %v569, %v568
    %v579 = vpack.c.b16 %v571, %v570
    %588 = vmatprep.subr.bf16.mxu0 0
    %589 = vmatpush1.bf16.msra.mxu0 %v579
    %590 = vmatprep.subr.bf16.mxu0 0
    %591 = vmatpush1.bf16.msra.mxu0 %v578
    %592 = vmatprep.subr.bf16.mxu0 0
    %593 = vmatpush1.bf16.msra.mxu0 %v577
    %594 = vmatprep.subr.bf16.mxu0 0
    %595 = vmatpush1.bf16.msra.mxu0 %v576
    %596 = vmatprep.subr.bf16.mxu0 0
    %597 = vmatpush1.bf16.msra.mxu0 %v575
    %598 = vmatprep.subr.bf16.mxu0 0
    %599 = vmatpush1.bf16.msra.mxu0 %v574
    %600 = vmatprep.subr.bf16.mxu0 0
    %601 = vmatpush1.bf16.msra.mxu0 %v573
    %602 = vmatprep.subr.bf16.mxu0 0
    %603 = vmatpush1.bf16.msra.mxu0 %v572
    %604 = vmatprep.subr.bf16.mxu0 0
    %605 = vmatpush2.bf16.msra.mxu0 0
    %606 = vmatprep.subr.bf16.mxu0 0
    %607 = vmatpush2.bf16.msra.mxu0 0
    %608 = vmatprep.subr.bf16.mxu0 0
    %609 = vmatpush2.bf16.msra.mxu0 0
    %610 = vmatprep.subr.bf16.mxu0 0
    %611 = vmatpush2.bf16.msra.mxu0 0
    %612 = vmatprep.subr.bf16.mxu0 0
    %613 = vmatpush2.bf16.msra.mxu0 0
    %614 = vmatprep.subr.bf16.mxu0 0
    %615 = vmatpush2.bf16.msra.mxu0 0
    %616 = vmatprep.subr.bf16.mxu0 0
    %617 = vmatpush2.bf16.msra.mxu0 0
    %618 = vmatprep.subr.bf16.mxu0 0
    %619 = vmatpush2.bf16.msra.mxu0 0
    %620 = vmatprep.mubr.bf16.mxu0 0
    %621 = vmatmul.mubr.bf16.gmra.mxu0 %v516
    %v622 = vpop.f32.mrf.mxu0
    %v623 = vadd.f32 0.0, %v622
    %v624 = vpop.f32.mrf.mxu0
    %v625 = vpop.f32.mrf.mxu0
    %v626 = vadd.f32 0.0, %v625
    %v627 = vpop.f32.mrf.mxu0
    %628 = vmatprep.mubr.bf16.mxu0 0
    %629 = vmatmul.mubr.bf16.gmra.mxu0 %v517
    %v630 = vpop.f32.mrf.mxu0
    %v631 = vadd.f32 0.0, %v630
    %v632 = vpop.f32.mrf.mxu0
    %v633 = vpop.f32.mrf.mxu0
    %v634 = vadd.f32 0.0, %v633
    %v635 = vpop.f32.mrf.mxu0
    %636 = vmatprep.mubr.bf16.mxu0 0
    %637 = vmatmul.mubr.bf16.gmra.mxu0 %v518
    %v638 = vpop.f32.mrf.mxu0
    %v639 = vadd.f32 0.0, %v638
    %v640 = vpop.f32.mrf.mxu0
    %v641 = vpop.f32.mrf.mxu0
    %v642 = vadd.f32 0.0, %v641
    %v643 = vpop.f32.mrf.mxu0
    %644 = vmatprep.mubr.bf16.mxu0 0
    %645 = vmatmul.mubr.bf16.gmra.mxu0 %v519
    %v646 = vpop.f32.mrf.mxu0
    %v647 = vadd.f32 0.0, %v646
    %v648 = vpop.f32.mrf.mxu0
    %v649 = vpop.f32.mrf.mxu0
    %v650 = vadd.f32 0.0, %v649
    %v651 = vpop.f32.mrf.mxu0
    %652 = vmatprep.mubr.bf16.mxu0 0
    %653 = vmatmul.mubr.bf16.gmra.mxu0 %v520
    %v654 = vpop.f32.mrf.mxu0
    %v655 = vadd.f32 0.0, %v654
    %v656 = vpop.f32.mrf.mxu0
    %v657 = vpop.f32.mrf.mxu0
    %v658 = vadd.f32 0.0, %v657
    %v659 = vpop.f32.mrf.mxu0
    %660 = vmatprep.mubr.bf16.mxu0 0
    %661 = vmatmul.mubr.bf16.gmra.mxu0 %v521
    %v662 = vpop.f32.mrf.mxu0
    %v663 = vadd.f32 0.0, %v662
    %v664 = vpop.f32.mrf.mxu0
    %v665 = vpop.f32.mrf.mxu0
    %v666 = vadd.f32 0.0, %v665
    %v667 = vpop.f32.mrf.mxu0
    %668 = vmatprep.mubr.bf16.mxu0 0
    %669 = vmatmul.mubr.bf16.gmra.mxu0 %v522
    %v670 = vpop.f32.mrf.mxu0
    %v671 = vadd.f32 0.0, %v670
    %v672 = vpop.f32.mrf.mxu0
    %v673 = vpop.f32.mrf.mxu0
    %v674 = vadd.f32 0.0, %v673
    %v675 = vpop.f32.mrf.mxu0
    %676 = vmatprep.mubr.bf16.mxu0 0
    %677 = vmatmul.mubr.bf16.gmra.mxu0 %v523
    %v678 = vpop.f32.mrf.mxu0
    %v679 = vadd.f32 0.0, %v678
    %v680 = vpop.f32.mrf.mxu0
    %v681 = vpop.f32.mrf.mxu0
    %v682 = vadd.f32 0.0, %v681
    %v683 = vpop.f32.mrf.mxu0
    %684 = vdwg.mxu0
    %v685 = vpack.c.bf16 %v626, %v623
    %v686 = vpack.c.bf16 %v634, %v631
    %v687 = vpack.c.bf16 %v642, %v639
    %v688 = vpack.c.bf16 %v650, %v647
    %v689 = vpack.c.bf16 %v658, %v655
    %v690 = vpack.c.bf16 %v666, %v663
    %v691 = vpack.c.bf16 %v674, %v671
    %v692 = vpack.c.bf16 %v682, %v679
    %v693 = vld [vmem:[%s5] sm:$0x1]
    %v695 = vlaneseq
    %v696 = vshrl.u32 %v695, 7
    %v697 = vsub.s32 0, %v696
    %v698 = vrot.slane %v693, %v697
    %700 = vmatprep.subr.bf16.mxu0 0
    %701 = vmatpush1.bf16.msra.mxu0 %v692
    %702 = vmatprep.subr.bf16.mxu0 0
    %703 = vmatpush1.bf16.msra.mxu0 %v691
    %704 = vmatprep.subr.bf16.mxu0 0
    %705 = vmatpush1.bf16.msra.mxu0 %v690
    %706 = vmatprep.subr.bf16.mxu0 0
    %707 = vmatpush1.bf16.msra.mxu0 %v689
    %708 = vmatprep.subr.bf16.mxu0 0
    %709 = vmatpush1.bf16.msra.mxu0 %v688
    %710 = vmatprep.subr.bf16.mxu0 0
    %711 = vmatpush1.bf16.msra.mxu0 %v687
    %712 = vmatprep.subr.bf16.mxu0 0
    %713 = vmatpush1.bf16.msra.mxu0 %v686
    %714 = vmatprep.subr.bf16.mxu0 0
    %715 = vmatpush1.bf16.msra.mxu0 %v685
    %716 = vmatprep.subr.bf16.mxu0 0
    %717 = vmatpush2.bf16.msra.mxu0 0
    %718 = vmatprep.subr.bf16.mxu0 0
    %719 = vmatpush2.bf16.msra.mxu0 0
    %720 = vmatprep.subr.bf16.mxu0 0
    %721 = vmatpush2.bf16.msra.mxu0 0
    %722 = vmatprep.subr.bf16.mxu0 0
    %723 = vmatpush2.bf16.msra.mxu0 0
    %724 = vmatprep.subr.bf16.mxu0 0
    %725 = vmatpush2.bf16.msra.mxu0 0
    %726 = vmatprep.subr.bf16.mxu0 0
    %727 = vmatpush2.bf16.msra.mxu0 0
    %728 = vmatprep.subr.bf16.mxu0 0
    %729 = vmatpush2.bf16.msra.mxu0 0
    %730 = vmatprep.subr.bf16.mxu0 0
    %731 = vmatpush2.bf16.msra.mxu0 0
    %732 = vmatprep.mubr.bf16.mxu0 0
    %733 = vmatmul.mubr.bf16.gmra.mxu0 %v387
    %v734 = vpop.f32.mrf.mxu0
    %v735 = vadd.f32 %v698, %v734
    %v736 = vpop.f32.mrf.mxu0
    %v737 = vpop.f32.mrf.mxu0
    %v738 = vadd.f32 %v698, %v737
    %v739 = vpop.f32.mrf.mxu0
    %740 = vmatprep.mubr.bf16.mxu0 0
    %741 = vmatmul.mubr.bf16.gmra.mxu0 %v388
    %v742 = vpop.f32.mrf.mxu0
    %v743 = vadd.f32 %v698, %v742
    %v744 = vpop.f32.mrf.mxu0
    %v745 = vpop.f32.mrf.mxu0
    %v746 = vadd.f32 %v698, %v745
    %v747 = vpop.f32.mrf.mxu0
    %748 = vmatprep.mubr.bf16.mxu0 0
    %749 = vmatmul.mubr.bf16.gmra.mxu0 %v389
    %v750 = vpop.f32.mrf.mxu0
    %v751 = vadd.f32 %v698, %v750
    %v752 = vpop.f32.mrf.mxu0
    %v753 = vpop.f32.mrf.mxu0
    %v754 = vadd.f32 %v698, %v753
    %v755 = vpop.f32.mrf.mxu0
    %756 = vmatprep.mubr.bf16.mxu0 0
    %757 = vmatmul.mubr.bf16.gmra.mxu0 %v390
    %v758 = vpop.f32.mrf.mxu0
    %v759 = vadd.f32 %v698, %v758
    %v760 = vpop.f32.mrf.mxu0
    %v761 = vpop.f32.mrf.mxu0
    %v762 = vadd.f32 %v698, %v761
    %v763 = vpop.f32.mrf.mxu0
    %764 = vmatprep.mubr.bf16.mxu0 0
    %765 = vmatmul.mubr.bf16.gmra.mxu0 %v391
    %v766 = vpop.f32.mrf.mxu0
    %v767 = vadd.f32 %v698, %v766
    %v768 = vpop.f32.mrf.mxu0
    %v769 = vpop.f32.mrf.mxu0
    %v770 = vadd.f32 %v698, %v769
    %v771 = vpop.f32.mrf.mxu0
    %772 = vmatprep.mubr.bf16.mxu0 0
    %773 = vmatmul.mubr.bf16.gmra.mxu0 %v392
    %v774 = vpop.f32.mrf.mxu0
    %v775 = vadd.f32 %v698, %v774
    %v776 = vpop.f32.mrf.mxu0
    %v777 = vpop.f32.mrf.mxu0
    %v778 = vadd.f32 %v698, %v777
    %v779 = vpop.f32.mrf.mxu0
    %780 = vmatprep.mubr.bf16.mxu0 0
    %781 = vmatmul.mubr.bf16.gmra.mxu0 %v393
    %v782 = vpop.f32.mrf.mxu0
    %v783 = vadd.f32 %v698, %v782
    %v784 = vpop.f32.mrf.mxu0
    %v785 = vpop.f32.mrf.mxu0
    %v786 = vadd.f32 %v698, %v785
    %v787 = vpop.f32.mrf.mxu0
    %788 = vmatprep.mubr.bf16.mxu0 0
    %789 = vmatmul.mubr.bf16.gmra.mxu0 %v394
    %v790 = vpop.f32.mrf.mxu0
    %v791 = vadd.f32 %v698, %v790
    %v792 = vpop.f32.mrf.mxu0
    %v793 = vpop.f32.mrf.mxu0
    %v794 = vadd.f32 %v698, %v793
    %v795 = vpop.f32.mrf.mxu0
    %796 = vdwg.mxu0
    %v797 = vmax.f32 %v735, 0.0
    %v798 = vmax.f32 %v738, 0.0
    %v799 = vmax.f32 %v743, 0.0
    %v800 = vmax.f32 %v746, 0.0
    %v801 = vmax.f32 %v751, 0.0
    %v802 = vmax.f32 %v754, 0.0
    %v803 = vmax.f32 %v759, 0.0
    %v804 = vmax.f32 %v762, 0.0
    %v805 = vmax.f32 %v767, 0.0
    %v806 = vmax.f32 %v770, 0.0
    %v807 = vmax.f32 %v775, 0.0
    %v808 = vmax.f32 %v778, 0.0
    %v809 = vmax.f32 %v783, 0.0
    %v810 = vmax.f32 %v786, 0.0
    %v811 = vmax.f32 %v791, 0.0
    %v812 = vmax.f32 %v794, 0.0
    %v813 = vpack.c.bf16 %v798, %v797
    %v814 = vpack.c.bf16 %v800, %v799
    %v815 = vpack.c.bf16 %v802, %v801
    %v816 = vpack.c.bf16 %v804, %v803
    %v817 = vpack.c.bf16 %v806, %v805
    %v818 = vpack.c.bf16 %v808, %v807
    %v819 = vpack.c.bf16 %v810, %v809
    %v820 = vpack.c.bf16 %v812, %v811
    %v821 = vld [vmem:[#allocation10] sm:$0xf]
    %v822 = vld [vmem:[#allocation10 + $0x4] sm:$0xf]
    %v823 = vld [vmem:[#allocation10 + $0x8] sm:$0xf]
    %v824 = vld [vmem:[#allocation10 + $0xc] sm:$0xf]
    %v825 = vld [vmem:[#allocation10 + $0x10] sm:$0xf]
    %v826 = vld [vmem:[#allocation10 + $0x14] sm:$0xf]
    %v827 = vld [vmem:[#allocation10 + $0x18] sm:$0xf]
    %v828 = vld [vmem:[#allocation10 + $0x1c] sm:$0xf]
    %v829 = vld [vmem:[#allocation10 + $0x20] sm:$0xf]
    %v830 = vld [vmem:[#allocation10 + $0x24] sm:$0xf]
    %v831 = vld [vmem:[#allocation10 + $0x28] sm:$0xf]
    %v832 = vld [vmem:[#allocation10 + $0x2c] sm:$0xf]
    %v833 = vld [vmem:[#allocation10 + $0x30] sm:$0xf]
    %v834 = vld [vmem:[#allocation10 + $0x34] sm:$0xf]
    %v835 = vld [vmem:[#allocation10 + $0x38] sm:$0xf]
    %v836 = vld [vmem:[#allocation10 + $0x3c] sm:$0xf]
    %v853 = vunpack.c.l.b16 %v821
    %v854 = vunpack.c.l.b16 %v822
    %v855 = vunpack.c.l.b16 %v823
    %v856 = vunpack.c.l.b16 %v824
    %v857 = vunpack.c.l.b16 %v825
    %v858 = vunpack.c.l.b16 %v826
    %v859 = vunpack.c.l.b16 %v827
    %v860 = vunpack.c.l.b16 %v828
    %v861 = vunpack.c.l.b16 %v829
    %v862 = vunpack.c.l.b16 %v830
    %v863 = vunpack.c.l.b16 %v831
    %v864 = vunpack.c.l.b16 %v832
    %v865 = vunpack.c.l.b16 %v833
    %v866 = vunpack.c.l.b16 %v834
    %v867 = vunpack.c.l.b16 %v835
    %v868 = vunpack.c.l.b16 %v836
    %v869 = vpack.c.b16 %v854, %v853
    %v870 = vpack.c.b16 %v856, %v855
    %v871 = vpack.c.b16 %v858, %v857
    %v872 = vpack.c.b16 %v860, %v859
    %v873 = vpack.c.b16 %v862, %v861
    %v874 = vpack.c.b16 %v864, %v863
    %v875 = vpack.c.b16 %v866, %v865
    %v876 = vpack.c.b16 %v868, %v867
    %885 = vmatprep.subr.bf16.mxu0 0
    %886 = vmatpush1.bf16.msra.mxu0 %v876
    %887 = vmatprep.subr.bf16.mxu0 0
    %888 = vmatpush1.bf16.msra.mxu0 %v875
    %889 = vmatprep.subr.bf16.mxu0 0
    %890 = vmatpush1.bf16.msra.mxu0 %v874
    %891 = vmatprep.subr.bf16.mxu0 0
    %892 = vmatpush1.bf16.msra.mxu0 %v873
    %893 = vmatprep.subr.bf16.mxu0 0
    %894 = vmatpush1.bf16.msra.mxu0 %v872
    %895 = vmatprep.subr.bf16.mxu0 0
    %896 = vmatpush1.bf16.msra.mxu0 %v871
    %897 = vmatprep.subr.bf16.mxu0 0
    %898 = vmatpush1.bf16.msra.mxu0 %v870
    %899 = vmatprep.subr.bf16.mxu0 0
    %900 = vmatpush1.bf16.msra.mxu0 %v869
    %901 = vmatprep.subr.bf16.mxu0 0
    %902 = vmatpush2.bf16.msra.mxu0 0
    %903 = vmatprep.subr.bf16.mxu0 0
    %904 = vmatpush2.bf16.msra.mxu0 0
    %905 = vmatprep.subr.bf16.mxu0 0
    %906 = vmatpush2.bf16.msra.mxu0 0
    %907 = vmatprep.subr.bf16.mxu0 0
    %908 = vmatpush2.bf16.msra.mxu0 0
    %909 = vmatprep.subr.bf16.mxu0 0
    %910 = vmatpush2.bf16.msra.mxu0 0
    %911 = vmatprep.subr.bf16.mxu0 0
    %912 = vmatpush2.bf16.msra.mxu0 0
    %913 = vmatprep.subr.bf16.mxu0 0
    %914 = vmatpush2.bf16.msra.mxu0 0
    %915 = vmatprep.subr.bf16.mxu0 0
    %916 = vmatpush2.bf16.msra.mxu0 0
    %917 = vmatprep.mubr.bf16.mxu0 0
    %918 = vmatmul.mubr.bf16.gmra.mxu0 %v813
    %v919 = vpop.f32.mrf.mxu0
    %v920 = vadd.f32 0.0, %v919
    %v921 = vpop.f32.mrf.mxu0
    %v922 = vpop.f32.mrf.mxu0
    %v923 = vadd.f32 0.0, %v922
    %v924 = vpop.f32.mrf.mxu0
    %925 = vmatprep.mubr.bf16.mxu0 0
    %926 = vmatmul.mubr.bf16.gmra.mxu0 %v814
    %v927 = vpop.f32.mrf.mxu0
    %v928 = vadd.f32 0.0, %v927
    %v929 = vpop.f32.mrf.mxu0
    %v930 = vpop.f32.mrf.mxu0
    %v931 = vadd.f32 0.0, %v930
    %v932 = vpop.f32.mrf.mxu0
    %933 = vmatprep.mubr.bf16.mxu0 0
    %934 = vmatmul.mubr.bf16.gmra.mxu0 %v815
    %v935 = vpop.f32.mrf.mxu0
    %v936 = vadd.f32 0.0, %v935
    %v937 = vpop.f32.mrf.mxu0
    %v938 = vpop.f32.mrf.mxu0
    %v939 = vadd.f32 0.0, %v938
    %v940 = vpop.f32.mrf.mxu0
    %941 = vmatprep.mubr.bf16.mxu0 0
    %942 = vmatmul.mubr.bf16.gmra.mxu0 %v816
    %v943 = vpop.f32.mrf.mxu0
    %v944 = vadd.f32 0.0, %v943
    %v945 = vpop.f32.mrf.mxu0
    %v946 = vpop.f32.mrf.mxu0
    %v947 = vadd.f32 0.0, %v946
    %v948 = vpop.f32.mrf.mxu0
    %949 = vmatprep.mubr.bf16.mxu0 0
    %950 = vmatmul.mubr.bf16.gmra.mxu0 %v817
    %v951 = vpop.f32.mrf.mxu0
    %v952 = vadd.f32 0.0, %v951
    %v953 = vpop.f32.mrf.mxu0
    %v954 = vpop.f32.mrf.mxu0
    %v955 = vadd.f32 0.0, %v954
    %v956 = vpop.f32.mrf.mxu0
    %957 = vmatprep.mubr.bf16.mxu0 0
    %958 = vmatmul.mubr.bf16.gmra.mxu0 %v818
    %v959 = vpop.f32.mrf.mxu0
    %v960 = vadd.f32 0.0, %v959
    %v961 = vpop.f32.mrf.mxu0
    %v962 = vpop.f32.mrf.mxu0
    %v963 = vadd.f32 0.0, %v962
    %v964 = vpop.f32.mrf.mxu0
    %965 = vmatprep.mubr.bf16.mxu0 0
    %966 = vmatmul.mubr.bf16.gmra.mxu0 %v819
    %v967 = vpop.f32.mrf.mxu0
    %v968 = vadd.f32 0.0, %v967
    %v969 = vpop.f32.mrf.mxu0
    %v970 = vpop.f32.mrf.mxu0
    %v971 = vadd.f32 0.0, %v970
    %v972 = vpop.f32.mrf.mxu0
    %973 = vmatprep.mubr.bf16.mxu0 0
    %974 = vmatmul.mubr.bf16.gmra.mxu0 %v820
    %v975 = vpop.f32.mrf.mxu0
    %v976 = vadd.f32 0.0, %v975
    %v977 = vpop.f32.mrf.mxu0
    %v978 = vpop.f32.mrf.mxu0
    %v979 = vadd.f32 0.0, %v978
    %v980 = vpop.f32.mrf.mxu0
    %981 = vdwg.mxu0
    %v982 = vpack.c.bf16 %v923, %v920
    %v983 = vpack.c.bf16 %v931, %v928
    %v984 = vpack.c.bf16 %v939, %v936
    %v985 = vpack.c.bf16 %v947, %v944
    %v986 = vpack.c.bf16 %v955, %v952
    %v987 = vpack.c.bf16 %v963, %v960
    %v988 = vpack.c.bf16 %v971, %v968
    %v989 = vpack.c.bf16 %v979, %v976
    %v990 = vld [vmem:[%s7] sm:$0x1]
    %v992 = vlaneseq
    %v993 = vshrl.u32 %v992, 7
    %v994 = vsub.s32 0, %v993
    %v995 = vrot.slane %v990, %v994
    %997 = vmatprep.subr.bf16.mxu0 0
    %998 = vmatpush1.bf16.msra.mxu0 %v989
    %999 = vmatprep.subr.bf16.mxu0 0
    %1000 = vmatpush1.bf16.msra.mxu0 %v988
    %1001 = vmatprep.subr.bf16.mxu0 0
    %1002 = vmatpush1.bf16.msra.mxu0 %v987
    %1003 = vmatprep.subr.bf16.mxu0 0
    %1004 = vmatpush1.bf16.msra.mxu0 %v986
    %1005 = vmatprep.subr.bf16.mxu0 0
    %1006 = vmatpush1.bf16.msra.mxu0 %v985
    %1007 = vmatprep.subr.bf16.mxu0 0
    %1008 = vmatpush1.bf16.msra.mxu0 %v984
    %1009 = vmatprep.subr.bf16.mxu0 0
    %1010 = vmatpush1.bf16.msra.mxu0 %v983
    %1011 = vmatprep.subr.bf16.mxu0 0
    %1012 = vmatpush1.bf16.msra.mxu0 %v982
    %1013 = vmatprep.subr.bf16.mxu0 0
    %1014 = vmatpush2.bf16.msra.mxu0 0
    %1015 = vmatprep.subr.bf16.mxu0 0
    %1016 = vmatpush2.bf16.msra.mxu0 0
    %1017 = vmatprep.subr.bf16.mxu0 0
    %1018 = vmatpush2.bf16.msra.mxu0 0
    %1019 = vmatprep.subr.bf16.mxu0 0
    %1020 = vmatpush2.bf16.msra.mxu0 0
    %1021 = vmatprep.subr.bf16.mxu0 0
    %1022 = vmatpush2.bf16.msra.mxu0 0
    %1023 = vmatprep.subr.bf16.mxu0 0
    %1024 = vmatpush2.bf16.msra.mxu0 0
    %1025 = vmatprep.subr.bf16.mxu0 0
    %1026 = vmatpush2.bf16.msra.mxu0 0
    %1027 = vmatprep.subr.bf16.mxu0 0
    %1028 = vmatpush2.bf16.msra.mxu0 0
    %1029 = vmatprep.mubr.bf16.mxu0 0
    %1030 = vmatmul.mubr.bf16.gmra.mxu0 %v387
    %v1031 = vpop.f32.mrf.mxu0
    %v1032 = vadd.f32 %v995, %v1031
    %v1033 = vpop.f32.mrf.mxu0
    %v1034 = vpop.f32.mrf.mxu0
    %v1035 = vadd.f32 %v995, %v1034
    %v1036 = vpop.f32.mrf.mxu0
    %1037 = vmatprep.mubr.bf16.mxu0 0
    %1038 = vmatmul.mubr.bf16.gmra.mxu0 %v388
    %v1039 = vpop.f32.mrf.mxu0
    %v1040 = vadd.f32 %v995, %v1039
    %v1041 = vpop.f32.mrf.mxu0
    %v1042 = vpop.f32.mrf.mxu0
    %v1043 = vadd.f32 %v995, %v1042
    %v1044 = vpop.f32.mrf.mxu0
    %1045 = vmatprep.mubr.bf16.mxu0 0
    %1046 = vmatmul.mubr.bf16.gmra.mxu0 %v389
    %v1047 = vpop.f32.mrf.mxu0
    %v1048 = vadd.f32 %v995, %v1047
    %v1049 = vpop.f32.mrf.mxu0
    %v1050 = vpop.f32.mrf.mxu0
    %v1051 = vadd.f32 %v995, %v1050
    %v1052 = vpop.f32.mrf.mxu0
    %1053 = vmatprep.mubr.bf16.mxu0 0
    %1054 = vmatmul.mubr.bf16.gmra.mxu0 %v390
    %v1055 = vpop.f32.mrf.mxu0
    %v1056 = vadd.f32 %v995, %v1055
    %v1057 = vpop.f32.mrf.mxu0
    %v1058 = vpop.f32.mrf.mxu0
    %v1059 = vadd.f32 %v995, %v1058
    %v1060 = vpop.f32.mrf.mxu0
    %1061 = vmatprep.mubr.bf16.mxu0 0
    %1062 = vmatmul.mubr.bf16.gmra.mxu0 %v391
    %v1063 = vpop.f32.mrf.mxu0
    %v1064 = vadd.f32 %v995, %v1063
    %v1065 = vpop.f32.mrf.mxu0
    %v1066 = vpop.f32.mrf.mxu0
    %v1067 = vadd.f32 %v995, %v1066
    %v1068 = vpop.f32.mrf.mxu0
    %1069 = vmatprep.mubr.bf16.mxu0 0
    %1070 = vmatmul.mubr.bf16.gmra.mxu0 %v392
    %v1071 = vpop.f32.mrf.mxu0
    %v1072 = vadd.f32 %v995, %v1071
    %v1073 = vpop.f32.mrf.mxu0
    %v1074 = vpop.f32.mrf.mxu0
    %v1075 = vadd.f32 %v995, %v1074
    %v1076 = vpop.f32.mrf.mxu0
    %1077 = vmatprep.mubr.bf16.mxu0 0
    %1078 = vmatmul.mubr.bf16.gmra.mxu0 %v393
    %v1079 = vpop.f32.mrf.mxu0
    %v1080 = vadd.f32 %v995, %v1079
    %v1081 = vpop.f32.mrf.mxu0
    %v1082 = vpop.f32.mrf.mxu0
    %v1083 = vadd.f32 %v995, %v1082
    %v1084 = vpop.f32.mrf.mxu0
    %1085 = vmatprep.mubr.bf16.mxu0 0
    %1086 = vmatmul.mubr.bf16.gmra.mxu0 %v394
    %v1087 = vpop.f32.mrf.mxu0
    %v1088 = vadd.f32 %v995, %v1087
    %v1089 = vpop.f32.mrf.mxu0
    %v1090 = vpop.f32.mrf.mxu0
    %v1091 = vadd.f32 %v995, %v1090
    %v1092 = vpop.f32.mrf.mxu0
    %1093 = vdwg.mxu0
    %1094 = vst [vmem:[#allocation11] sm:$0xff] %v1032
    %1095 = vst [vmem:[#allocation11 + $0x8] sm:$0xff] %v1035
    %1096 = vst [vmem:[#allocation11 + $0x10] sm:$0xff] %v1040
    %1097 = vst [vmem:[#allocation11 + $0x18] sm:$0xff] %v1043
    %1098 = vst [vmem:[#allocation11 + $0x20] sm:$0xff] %v1048
    %1099 = vst [vmem:[#allocation11 + $0x28] sm:$0xff] %v1051
    %1100 = vst [vmem:[#allocation11 + $0x30] sm:$0xff] %v1056
    %1101 = vst [vmem:[#allocation11 + $0x38] sm:$0xff] %v1059
    %1102 = vst [vmem:[#allocation11 + $0x40] sm:$0xff] %v1064
    %1103 = vst [vmem:[#allocation11 + $0x48] sm:$0xff] %v1067
    %1104 = vst [vmem:[#allocation11 + $0x50] sm:$0xff] %v1072
    %1105 = vst [vmem:[#allocation11 + $0x58] sm:$0xff] %v1075
    %1106 = vst [vmem:[#allocation11 + $0x60] sm:$0xff] %v1080
    %1107 = vst [vmem:[#allocation11 + $0x68] sm:$0xff] %v1083
    %1108 = vst [vmem:[#allocation11 + $0x70] sm:$0xff] %v1088
    %1109 = vst [vmem:[#allocation11 + $0x78] sm:$0xff] %v1091
    // Predicated region
    $region54: #{tpu_custom_call.1} parent=1 // pred_check
      _
    $region55: #{tpu_custom_call.1} parent=1 // pred_check_branch
      %1111 = sbr.rel (0) target = $region57
    $region56: #{tpu_custom_call.1} parent=1 // pred_region
      %s1113 = ssub.s32 2048, 2048
      %1114 = vsyncadd [#allocation4], %s1113
      %s1115 = sshll.u32 [#allocation11], 4
      %s1116 = int_to_ptr.vmem [resolvable:$true] %s1115
      %1121 = dma.vmem_to_hbm [thread:$0]  %s1116, 2048, %s8, [#allocation4], 128, 128, 8
    $region57: #{tpu_custom_call.1} parent=1 // pred_fallthru
      _
    // Predicated region
    $region58: #{tpu_custom_call.1} parent=1 // pred_check
      _
    $region59: #{tpu_custom_call.1} parent=1 // pred_check_branch
      %1123 = sbr.rel (0) target = $region61
    $region60: #{tpu_custom_call.1} parent=1 // pred_region
      %1124 = dma.done [#allocation4], 2048
    $region61: #{tpu_custom_call.1} parent=1 // pred_fallthru
      _
    %1125 = vsyncpa [#allocation3], 1
    %1126 = vsyncpa [#allocation6], 1
    %1127 = vsyncpa [#allocation9], 1
    %1128 = vsyncpa [#allocation4], 1

</llo_original>
